<compile_context>
chip_gen: v5e
topology: v5e:2x2
jax: 0.10.0
libtpu: 0.0.40
codegen_flags: <defaults>
</compile_context>

<pallas_src>
import jax
import jax.numpy as jnp
from jax.experimental import pallas as pl
from jax.experimental.pallas import tpu as pltpu


def _round_up(x, m):
    return (x + m - 1) // m * m


def _cdiv(a, b):
    return (a + b - 1) // b


def _vmem_capacity_bytes():
    """Physical VMEM per TensorCore; conservative default if the query fails."""
    try:
        return int(pltpu.get_tpu_info().vmem_capacity_bytes)
    except Exception:
        return 64 << 20  # v7x per-TC size — safe lower bound for all generations


def _fused_head_kernel(x_ref, w_ref, b_ref, out_ref):
    """One canonical (M,K)x(K,N) MXU matmul produces both heads.

    x_ref:   (TILE_N, D_pad)   RoI feature row tile (f32 or bf16).
    w_ref:   (D_pad, OUT_pad)  fused [fc_cls; fc_reg] weight, pre-transposed.
    b_ref:   (1, OUT_pad)      fused f32 bias row.
    out_ref: (TILE_N, OUT_pad) lane-dense f32 output slab.
    """
    out_ref[...] = (
        jnp.dot(x_ref[...], w_ref[...], preferred_element_type=jnp.float32)
        + b_ref[...]
    )


def prepare_bbox_head_params(wc, bc, wr, br, *, weight_dtype=jnp.float32):
    """Fuse + pad + transpose the cls/reg params ONCE (one-time parameter prep).

    Returns:
      w_fused: (D_pad, OUT_pad) fused weight, contraction dim first.
      b_fused: (1, OUT_pad) fused bias row.
    Padded rows/cols are exactly zero, so they contribute nothing downstream
    and are sliced off after the kernel.
    """
    num_classes, d = wc.shape
    out_reg = wr.shape[0]
    out_total = num_classes + out_reg
    d_pad = _round_up(d, 128)
    out_pad = _round_up(out_total, 128)

    w = jnp.concatenate([wc, wr], axis=0).astype(jnp.float32)        # (out_total, D)
    w = jnp.pad(w, ((0, out_pad - out_total), (0, d_pad - d)))        # (OUT_pad, D_pad)
    w = w.T.astype(weight_dtype)                                      # (D_pad, OUT_pad)
    b = jnp.concatenate([bc, br], axis=0).astype(jnp.float32)         # (out_total,)
    b = jnp.pad(b, (0, out_pad - out_total)).reshape(1, out_pad)      # (1, OUT_pad)
    return w, b


def bbox_head_forward(x_nchw, wc, bc, wr, br, *, use_bf16=False, tile_n_max=None):
    """BBoxHead.forward.

    Args:
      x_nchw: (N, C, H, W) RoI features.
      wc: (num_classes, D)   fc_cls weight (PyTorch layout, D = C*H*W).
      bc: (num_classes,)     fc_cls bias.
      wr: (4*num_classes, D) fc_reg weight.
      br: (4*num_classes,)   fc_reg bias.
      use_bf16: cast x and W to bfloat16 at the kernel boundary (f32 accumulate,
        f32 bias/output). ~2x on a memory-bound kernel; not bit-exact vs torch.
      tile_n_max: optional override for max rows per grid step; default is
        generation-aware (256 on 128 MiB-VMEM parts, 128 on v7x).
    Returns:
      (cls_score, bbox_pred): (N, num_classes), (N, 4*num_classes) float32.
    """
    n = x_nchw.shape[0]
    d = x_nchw.shape[1] * x_nchw.shape[2] * x_nchw.shape[3]
    num_classes = wc.shape[0]
    out_reg = wr.shape[0]

    in_dtype = jnp.bfloat16 if use_bf16 else jnp.float32

    # NOTE: parameter prep — in a real pipeline call prepare_bbox_head_params
    # once (outside the per-step hot path) and reuse w_fused / b_fused.
    w_fused, b_fused = prepare_bbox_head_params(wc, bc, wr, br, weight_dtype=in_dtype)
    d_pad, out_pad = w_fused.shape

    # Flatten is a free metadata reshape (no HBM pass). x is only padded along D
    # when D is not lane-aligned (production D = 12544 is, so no extra pass).
    x_flat = x_nchw.reshape(n, d).astype(in_dtype)
    if d_pad != d:
        x_flat = jnp.pad(x_flat, ((0, 0), (0, d_pad - d)))

    vmem_cap = _vmem_capacity_bytes()
    if tile_n_max is None:
        tile_n_max = 256 if vmem_cap >= (100 << 20) else 128  # v5e/v6e vs v7x

    tile_n = min(tile_n_max, _round_up(n, 8))
    # Small-N: split into >= 2 grid steps so both v7x TensorCores get work
    # (negligible extra per-step overhead on single-TC parts).
    if n > 8 and _cdiv(n, tile_n) < 2:
        tile_n = _round_up(_cdiv(n, 2), 8)

    x_bytes = jnp.dtype(in_dtype).itemsize

    def vmem_needed(t):
        # Conservative: budget a double-buffered weight so the fallback
        # (default buffering) path also fits.
        return (2 * t * d_pad * x_bytes           # x tile (double-buffered)
                + 2 * t * out_pad * 4             # out tile (double-buffered)
                + 2 * d_pad * out_pad * x_bytes   # fused weight
                + 2 * 8 * out_pad * 4)            # bias row (sublane-padded)

    # Shrink tile_n if the budget exceeds this generation's VMEM.
    while tile_n > 8 and vmem_needed(tile_n) > int(0.7 * vmem_cap):
        tile_n = max(8, _round_up(tile_n // 2, 8))

    grid = (_cdiv(n, tile_n),)  # last tile may be partial: write-masked, no N pad

    vmem_limit = int(min(max(vmem_needed(tile_n) + (2 << 20), 8 << 20),
                         int(0.75 * vmem_cap)))

    cost = pl.CostEstimate(
        flops=2 * n * d_pad * out_pad,
        transcendentals=0,
        bytes_accessed=(n * d_pad * x_bytes + d_pad * out_pad * x_bytes
                        + out_pad * 4 + n * out_pad * 4),
    )

    def build_call(single_buffer_weights):
        if single_buffer_weights:
            # Grid-invariant weight/bias: DMA'd exactly once, no 2nd buffer needed.
            w_spec = pl.BlockSpec((d_pad, out_pad), lambda i: (0, 0),
                                  pipeline_mode=pl.Buffered(1))
            b_spec = pl.BlockSpec((1, out_pad), lambda i: (0, 0),
                                  pipeline_mode=pl.Buffered(1))
        else:
            w_spec = pl.BlockSpec((d_pad, out_pad), lambda i: (0, 0))
            b_spec = pl.BlockSpec((1, out_pad), lambda i: (0, 0))
        return pl.pallas_call(
            _fused_head_kernel,
            out_shape=jax.ShapeDtypeStruct((n, out_pad), jnp.float32),
            grid=grid,
            in_specs=[
                pl.BlockSpec((tile_n, d_pad), lambda i: (i, 0)),  # x: tiled over N
                w_spec,                                           # W: VMEM-resident
                b_spec,                                           # b: VMEM-resident
            ],
            out_specs=pl.BlockSpec((tile_n, out_pad), lambda i: (i, 0)),
            compiler_params=pltpu.CompilerParams(
                dimension_semantics=("parallel",),  # no-op on 1-TC parts; v7x megacore
                vmem_limit_bytes=vmem_limit,
            ),
            cost_estimate=cost,
        )

    try:
        fused_out = build_call(True)(x_flat, w_fused, b_fused)
    except Exception:
        # pl.Buffered(1) not accepted by this jax version for top-level
        # pallas_call pipelining — fall back to default double-buffering.
        fused_out = build_call(False)(x_flat, w_fused, b_fused)

    # Slice the lane-padded fused slab into the two heads (padded columns are
    # exactly zero-weight / zero-bias, so they never leak downstream).
    cls_score = fused_out[:, :num_classes]
    bbox_pred = fused_out[:, num_classes:num_classes + out_reg]
    return cls_score, bbox_pred


if __name__ == "__main__":
    # Small, module-consistent shapes:
    #   N (num RoIs) = 8, in_channels = 16, roi_feat_size = 7 -> D = 16*7*7 = 784
    #   num_classes = 12 -> cls out = 12, reg out = 48 (reg_class_agnostic=False)
    N, C, S = 8, 16, 7
    NUM_CLASSES = 12
    D = C * S * S
    OUT_REG = 4 * NUM_CLASSES

    key = jax.random.PRNGKey(0)
    kx, kwc, kwr = jax.random.split(key, 3)

    x = jax.random.normal(kx, (N, C, S, S), dtype=jnp.float32)

    # Deterministic parameter init mirroring BBoxHead.init_weights():
    #   fc_cls.weight ~ N(0, 0.01), bias = 0 ; fc_reg.weight ~ N(0, 0.001), bias = 0
    wc = 0.01 * jax.random.normal(kwc, (NUM_CLASSES, D), dtype=jnp.float32)
    bc = jnp.zeros((NUM_CLASSES,), dtype=jnp.float32)
    wr = 0.001 * jax.random.normal(kwr, (OUT_REG, D), dtype=jnp.float32)
    br = jnp.zeros((OUT_REG,), dtype=jnp.float32)

    # Default f32 path (parity with the PyTorch module).
    cls_score, bbox_pred = bbox_head_forward(x, wc, bc, wr, br)
    jax.block_until_ready((cls_score, bbox_pred))

    # Reference check against plain-JAX forward (same math as the torch module).
    x_flat = x.reshape(N, -1)
    cls_ref = x_flat @ wc.T + bc
    reg_ref = x_flat @ wr.T + br
    assert cls_score.shape == (N, NUM_CLASSES)
    assert bbox_pred.shape == (N, OUT_REG)
    assert jnp.allclose(cls_score, cls_ref, atol=1e-4, rtol=1e-4)
    assert jnp.allclose(bbox_pred, reg_ref, atol=1e-4, rtol=1e-4)

    # Optional bf16 input path (halves the dominant HBM stream) — looser tolerance.
    cls_bf16, reg_bf16 = bbox_head_forward(x, wc, bc, wr, br, use_bf16=True)
    jax.block_until_ready((cls_bf16, reg_bf16))
    assert jnp.allclose(cls_bf16, cls_ref, atol=3e-2, rtol=3e-2)
    assert jnp.allclose(reg_bf16, reg_ref, atol=3e-2, rtol=3e-2)

    # TODO(synk): loss/get_target/get_det_bboxes/refine_bboxes (CE/SmoothL1,
    # bbox_target, delta2bbox + multiclass NMS) are training/post-processing
    # utilities, not part of forward(); not implemented as kernels.
    print("KERNEL_OK")
</pallas_src>

<mosaic_0001>
module attributes {stable_mosaic.version = 11 : i64} {
  func.func @_fused_head_kernel(%arg0: i32, %arg1: memref<8x896xf32, #tpu.memory_space<vmem>>, %arg2: memref<896x128xf32, #tpu.memory_space<vmem>>, %arg3: memref<1x128xf32, #tpu.memory_space<vmem>>, %arg4: memref<8x128xf32, #tpu.memory_space<vmem>>) attributes {dimension_semantics = [#tpu.dimension_semantics<parallel>], iteration_bounds = array<i64: 1>, scalar_prefetch = 0 : i64, scratch_operands = 0 : i64, tpu.core_type = #tpu.core_type<tc>, window_params = [{transform_indices = @transform_0, window_bounds = array<i64: 8, 896>}, {pipeline_mode = #tpu.pipeline_mode<synchronous>, transform_indices = @transform_1, window_bounds = array<i64: 896, 128>}, {pipeline_mode = #tpu.pipeline_mode<synchronous>, transform_indices = @transform_2, window_bounds = array<i64: 1, 128>}, {transform_indices = @transform_3, window_bounds = array<i64: 8, 128>}]} {
    %c0 = arith.constant 0 : index
    %c0_0 = arith.constant 0 : index
    %0 = vector.load %arg1[%c0, %c0_0] : memref<8x896xf32, #tpu.memory_space<vmem>>, vector<8x896xf32>
    %c0_1 = arith.constant 0 : index
    %c0_2 = arith.constant 0 : index
    %1 = vector.load %arg2[%c0_1, %c0_2] : memref<896x128xf32, #tpu.memory_space<vmem>>, vector<896x128xf32>
    %cst = arith.constant dense<0.000000e+00> : vector<8x128xf32>
    %2 = tpu.matmul %0, %1, %cst {dimension_numbers = #tpu.dot_dimension_numbers<[1], [0], [0], [1], [0, 0, 1, 1], [], []>} : vector<8x896xf32>, vector<896x128xf32>, vector<8x128xf32> -> vector<8x128xf32>
    %c0_3 = arith.constant 0 : index
    %c0_4 = arith.constant 0 : index
    %3 = vector.load %arg3[%c0_3, %c0_4] : memref<1x128xf32, #tpu.memory_space<vmem>>, vector<1x128xf32>
    %4 = vector.broadcast %3 : vector<1x128xf32> to vector<8x128xf32>
    %5 = arith.addf %2, %4 : vector<8x128xf32>
    %c0_5 = arith.constant 0 : index
    %c0_6 = arith.constant 0 : index
    %6 = vector.load %arg4[%c0_5, %c0_6] : memref<8x128xf32, #tpu.memory_space<vmem>>, vector<8x128xf32>
    tpu.vector_store %arg4[%c0_5, %c0_6], %5 {strides = array<i32>} : memref<8x128xf32, #tpu.memory_space<vmem>>, vector<8x128xf32>,
    return
  }
  func.func @transform_0(%arg0: i32) -> (i32, i32) {
    %c0_i32 = arith.constant 0 : i32
    %c0_i32_0 = arith.constant 0 : i32
    return %arg0, %c0_i32 : i32, i32
  }
  func.func @transform_1(%arg0: i32) -> (i32, i32) {
    %c0_i32 = arith.constant 0 : i32
    %c0_i32_0 = arith.constant 0 : i32
    %c0_i32_1 = arith.constant 0 : i32
    return %c0_i32, %c0_i32_0 : i32, i32
  }
  func.func @transform_2(%arg0: i32) -> (i32, i32) {
    %c0_i32 = arith.constant 0 : i32
    %c0_i32_0 = arith.constant 0 : i32
    %c0_i32_1 = arith.constant 0 : i32
    return %c0_i32, %c0_i32_0 : i32, i32
  }
  func.func @transform_3(%arg0: i32) -> (i32, i32) {
    %c0_i32 = arith.constant 0 : i32
    %c0_i32_0 = arith.constant 0 : i32
    return %arg0, %c0_i32 : i32, i32
  }
}

module attributes {stable_mosaic.version = 11 : i64} {
  func.func @_fused_head_kernel(%arg0: i32, %arg1: memref<8x896xf32, #tpu.memory_space<vmem>>, %arg2: memref<896x128xf32, #tpu.memory_space<vmem>>, %arg3: memref<1x128xf32, #tpu.memory_space<vmem>>, %arg4: memref<8x128xf32, #tpu.memory_space<vmem>>) attributes {dimension_semantics = [#tpu.dimension_semantics<parallel>], iteration_bounds = array<i64: 1>, scalar_prefetch = 0 : i64, scratch_operands = 0 : i64, tpu.core_type = #tpu.core_type<tc>, window_params = [{transform_indices = @transform_0, window_bounds = array<i64: 8, 896>}, {pipeline_mode = #tpu.pipeline_mode<synchronous>, transform_indices = @transform_1, window_bounds = array<i64: 896, 128>}, {pipeline_mode = #tpu.pipeline_mode<synchronous>, transform_indices = @transform_2, window_bounds = array<i64: 1, 128>}, {transform_indices = @transform_3, window_bounds = array<i64: 8, 128>}]} {
    %c0 = arith.constant 0 : index
    %c0_0 = arith.constant 0 : index
    %0 = vector.load %arg1[%c0, %c0_0] : memref<8x896xf32, #tpu.memory_space<vmem>>, vector<8x896xf32>
    %c0_1 = arith.constant 0 : index
    %c0_2 = arith.constant 0 : index
    %1 = vector.load %arg2[%c0_1, %c0_2] : memref<896x128xf32, #tpu.memory_space<vmem>>, vector<896x128xf32>
    %cst = arith.constant dense<0.000000e+00> : vector<8x128xf32>
    %2 = tpu.matmul %0, %1, %cst {dimension_numbers = #tpu.dot_dimension_numbers<[1], [0], [0], [1], [0, 0, 1, 1], [], []>} : vector<8x896xf32>, vector<896x128xf32>, vector<8x128xf32> -> vector<8x128xf32>
    %c0_3 = arith.constant 0 : index
    %c0_4 = arith.constant 0 : index
    %3 = vector.load %arg3[%c0_3, %c0_4] : memref<1x128xf32, #tpu.memory_space<vmem>>, vector<1x128xf32>
    %4 = vector.broadcast %3 : vector<1x128xf32> to vector<8x128xf32>
    %5 = arith.addf %2, %4 : vector<8x128xf32>
    %c0_5 = arith.constant 0 : index
    %c0_6 = arith.constant 0 : index
    %6 = vector.load %arg4[%c0_5, %c0_6] : memref<8x128xf32, #tpu.memory_space<vmem>>, vector<8x128xf32>
    tpu.vector_store %arg4[%c0_5, %c0_6], %5 {strides = array<i32>} : memref<8x128xf32, #tpu.memory_space<vmem>>, vector<8x128xf32>,
    return
  }
  func.func @transform_0(%arg0: i32) -> (i32, i32) {
    %c0_i32 = arith.constant 0 : i32
    %c0_i32_0 = arith.constant 0 : i32
    return %arg0, %c0_i32 : i32, i32
  }
  func.func @transform_1(%arg0: i32) -> (i32, i32) {
    %c0_i32 = arith.constant 0 : i32
    %c0_i32_0 = arith.constant 0 : i32
    %c0_i32_1 = arith.constant 0 : i32
    return %c0_i32, %c0_i32_0 : i32, i32
  }
  func.func @transform_2(%arg0: i32) -> (i32, i32) {
    %c0_i32 = arith.constant 0 : i32
    %c0_i32_0 = arith.constant 0 : i32
    %c0_i32_1 = arith.constant 0 : i32
    return %c0_i32, %c0_i32_0 : i32, i32
  }
  func.func @transform_3(%arg0: i32) -> (i32, i32) {
    %c0_i32 = arith.constant 0 : i32
    %c0_i32_0 = arith.constant 0 : i32
    return %arg0, %c0_i32 : i32, i32
  }
}

</mosaic_0001>

<llo_original>
// kernel: tpu_custom_call.1
$region0: #{tpu_custom_call.1}
  #allocation0 [shape = 'u32[]', space=smem, size = 0x4, offset = 0x4, fixed_abs, tag = 'smem constant byte address 0x4 - core index']
  #allocation1 [shape = 'u32[72,128]{1,0:T(1,128)}', space=vmem, size = 0x9000, scoped, tag = 'internal scratch']
  %s0 = inlined_call_operand.hbm [shape: f32[8,896], index: 0, kind: input, shape index: {}]
  %s1 = inlined_call_operand.hbm [shape: f32[896,128], index: 1, kind: input, shape index: {}]
  %s2 = inlined_call_operand.vmem [shape: f32[1,128], index: 2, kind: input, shape index: {}]
  %s3 = inlined_call_operand.hbm [shape: f32[8,128], index: 3, kind: output, shape index: {}]
  %s4 = sld [smem:[#allocation0]]
  $region30: #{tpu_custom_call.1} parent=0
    _
  %s6 = ssub.s32 1, %s4
  %s7 = scalar_select 0, %s6, %s4
  $region1: #{tpu_custom_call.1} parent=0
    #allocation2 [shape = 'u8[28672]{0}', space=vmem, size = 0x7000, scoped, tag = 'input window, operand 0, single buffered']
    #allocation3 [shape = 's32[1]{0}', space=sflag, size = 0x4, scoped, tag = 'scoped memory for tpu_custom_call.1']
    #allocation4 [shape = 's32[1]{0}', space=sflag, size = 0x4, scoped, tag = 'scoped memory for tpu_custom_call.1']
    #allocation5 [shape = 'u8[458752]{0}', space=vmem, size = 0x70000, scoped, tag = 'input window, operand 1, single buffered']
    #allocation6 [shape = 's32[1]{0}', space=sflag, size = 0x4, scoped, tag = 'scoped memory for tpu_custom_call.1']
    #allocation7 [shape = 'u8[4096]{0}', space=vmem, size = 0x1000, scoped, tag = 'output window, operand 0, single buffered']
    %8 = vsyncpa [#allocation3], 0
    %9 = vsyncpa [#allocation6], 0
    %10 = vsyncpa [#allocation4], 0
    // Predicated region
    $region2: #{tpu_custom_call.1} parent=1 // pred_check
      _
    $region3: #{tpu_custom_call.1} parent=1 // pred_check_branch
      %12 = sbr.rel (0) target = $region5
    $region4: #{tpu_custom_call.1} parent=1 // pred_region
      %14 = vsyncadd [#allocation3], 0
      %s16 = sshll.u32 %s0, 4
      %s17 = int_to_ptr.hbm [resolvable:$true] %s16
      %s18 = sshll.u32 [#allocation2], 4
      %s19 = int_to_ptr.vmem [resolvable:$true] %s18
      %21 = dma.hbm_to_vmem [thread:$0]  %s17, 896, %s19, [#allocation3]
    $region5: #{tpu_custom_call.1} parent=1 // pred_fallthru
      _
    // Predicated region
    $region6: #{tpu_custom_call.1} parent=1 // pred_check
      _
    $region7: #{tpu_custom_call.1} parent=1 // pred_check_branch
      %23 = sbr.rel (0) target = $region9
    $region8: #{tpu_custom_call.1} parent=1 // pred_region
      %25 = vsyncadd [#allocation6], 0
      %s26 = sshll.u32 %s1, 4
      %s27 = int_to_ptr.hbm [resolvable:$true] %s26
      %s28 = sshll.u32 [#allocation5], 4
      %s29 = int_to_ptr.vmem [resolvable:$true] %s28
      %34 = dma.hbm_to_vmem [thread:$0]  %s27, 14336, %s29, [#allocation6], 128, 128, 8
    $region9: #{tpu_custom_call.1} parent=1 // pred_fallthru
      _
    // Predicated region
    $region10: #{tpu_custom_call.1} parent=1 // pred_check
      _
    $region11: #{tpu_custom_call.1} parent=1 // pred_check_branch
      %36 = sbr.rel (0) target = $region13
    $region12: #{tpu_custom_call.1} parent=1 // pred_region
      _
    $region13: #{tpu_custom_call.1} parent=1 // pred_fallthru
      _
    // Predicated region
    $region14: #{tpu_custom_call.1} parent=1 // pred_check
      _
    $region15: #{tpu_custom_call.1} parent=1 // pred_check_branch
      %38 = sbr.rel (0) target = $region17
    $region16: #{tpu_custom_call.1} parent=1 // pred_region
      %40 = dma.done [#allocation3], 896
    $region17: #{tpu_custom_call.1} parent=1 // pred_fallthru
      _
    // Predicated region
    $region18: #{tpu_custom_call.1} parent=1 // pred_check
      _
    $region19: #{tpu_custom_call.1} parent=1 // pred_check_branch
      %42 = sbr.rel (0) target = $region21
    $region20: #{tpu_custom_call.1} parent=1 // pred_region
      %44 = dma.done [#allocation6], 14336
    $region21: #{tpu_custom_call.1} parent=1 // pred_fallthru
      _
    %v45 = vld [vmem:[#allocation2] sm:$0xff]
    %v46 = vld [vmem:[#allocation2 + $0x8] sm:$0xff]
    %v47 = vld [vmem:[#allocation2 + $0x10] sm:$0xff]
    %v48 = vld [vmem:[#allocation2 + $0x18] sm:$0xff]
    %v49 = vld [vmem:[#allocation2 + $0x20] sm:$0xff]
    %v50 = vld [vmem:[#allocation2 + $0x28] sm:$0xff]
    %v51 = vld [vmem:[#allocation2 + $0x30] sm:$0xff]
    %v52 = vld [vmem:[#allocation5] sm:$0xff]
    %v53 = vld [vmem:[#allocation5 + $0x8] sm:$0xff]
    %v54 = vld [vmem:[#allocation5 + $0x10] sm:$0xff]
    %v55 = vld [vmem:[#allocation5 + $0x18] sm:$0xff]
    %v56 = vld [vmem:[#allocation5 + $0x20] sm:$0xff]
    %v57 = vld [vmem:[#allocation5 + $0x28] sm:$0xff]
    %v58 = vld [vmem:[#allocation5 + $0x30] sm:$0xff]
    %v59 = vld [vmem:[#allocation5 + $0x38] sm:$0xff]
    %v60 = vld [vmem:[#allocation5 + $0x40] sm:$0xff]
    %v61 = vld [vmem:[#allocation5 + $0x48] sm:$0xff]
    %v62 = vld [vmem:[#allocation5 + $0x50] sm:$0xff]
    %v63 = vld [vmem:[#allocation5 + $0x58] sm:$0xff]
    %v64 = vld [vmem:[#allocation5 + $0x60] sm:$0xff]
    %v65 = vld [vmem:[#allocation5 + $0x68] sm:$0xff]
    %v66 = vld [vmem:[#allocation5 + $0x70] sm:$0xff]
    %v67 = vld [vmem:[#allocation5 + $0x78] sm:$0xff]
    %v68 = vld [vmem:[#allocation5 + $0x80] sm:$0xff]
    %v69 = vld [vmem:[#allocation5 + $0x88] sm:$0xff]
    %v70 = vld [vmem:[#allocation5 + $0x90] sm:$0xff]
    %v71 = vld [vmem:[#allocation5 + $0x98] sm:$0xff]
    %v72 = vld [vmem:[#allocation5 + $0xa0] sm:$0xff]
    %v73 = vld [vmem:[#allocation5 + $0xa8] sm:$0xff]
    %v74 = vld [vmem:[#allocation5 + $0xb0] sm:$0xff]
    %v75 = vld [vmem:[#allocation5 + $0xb8] sm:$0xff]
    %v76 = vld [vmem:[#allocation5 + $0xc0] sm:$0xff]
    %v77 = vld [vmem:[#allocation5 + $0xc8] sm:$0xff]
    %v78 = vld [vmem:[#allocation5 + $0xd0] sm:$0xff]
    %v79 = vld [vmem:[#allocation5 + $0xd8] sm:$0xff]
    %v80 = vld [vmem:[#allocation5 + $0xe0] sm:$0xff]
    %v81 = vld [vmem:[#allocation5 + $0xe8] sm:$0xff]
    %v82 = vld [vmem:[#allocation5 + $0xf0] sm:$0xff]
    %v83 = vld [vmem:[#allocation5 + $0xf8] sm:$0xff]
    %v84 = vld [vmem:[#allocation5 + $0x100] sm:$0xff]
    %v85 = vld [vmem:[#allocation5 + $0x108] sm:$0xff]
    %v86 = vld [vmem:[#allocation5 + $0x110] sm:$0xff]
    %v87 = vld [vmem:[#allocation5 + $0x118] sm:$0xff]
    %v88 = vld [vmem:[#allocation5 + $0x120] sm:$0xff]
    %v89 = vld [vmem:[#allocation5 + $0x128] sm:$0xff]
    %v90 = vld [vmem:[#allocation5 + $0x130] sm:$0xff]
    %v91 = vld [vmem:[#allocation5 + $0x138] sm:$0xff]
    %v92 = vld [vmem:[#allocation5 + $0x140] sm:$0xff]
    %v93 = vld [vmem:[#allocation5 + $0x148] sm:$0xff]
    %v94 = vld [vmem:[#allocation5 + $0x150] sm:$0xff]
    %v95 = vld [vmem:[#allocation5 + $0x158] sm:$0xff]
    %v96 = vld [vmem:[#allocation5 + $0x160] sm:$0xff]
    %v97 = vld [vmem:[#allocation5 + $0x168] sm:$0xff]
    %v98 = vld [vmem:[#allocation5 + $0x170] sm:$0xff]
    %v99 = vld [vmem:[#allocation5 + $0x178] sm:$0xff]
    %v100 = vld [vmem:[#allocation5 + $0x180] sm:$0xff]
    %v101 = vld [vmem:[#allocation5 + $0x188] sm:$0xff]
    %v102 = vld [vmem:[#allocation5 + $0x190] sm:$0xff]
    %v103 = vld [vmem:[#allocation5 + $0x198] sm:$0xff]
    %v104 = vld [vmem:[#allocation5 + $0x1a0] sm:$0xff]
    %v105 = vld [vmem:[#allocation5 + $0x1a8] sm:$0xff]
    %v106 = vld [vmem:[#allocation5 + $0x1b0] sm:$0xff]
    %v107 = vld [vmem:[#allocation5 + $0x1b8] sm:$0xff]
    %v108 = vld [vmem:[#allocation5 + $0x1c0] sm:$0xff]
    %v109 = vld [vmem:[#allocation5 + $0x1c8] sm:$0xff]
    %v110 = vld [vmem:[#allocation5 + $0x1d0] sm:$0xff]
    %v111 = vld [vmem:[#allocation5 + $0x1d8] sm:$0xff]
    %v112 = vld [vmem:[#allocation5 + $0x1e0] sm:$0xff]
    %v113 = vld [vmem:[#allocation5 + $0x1e8] sm:$0xff]
    %v114 = vld [vmem:[#allocation5 + $0x1f0] sm:$0xff]
    %v115 = vld [vmem:[#allocation5 + $0x1f8] sm:$0xff]
    %v116 = vld [vmem:[#allocation5 + $0x200] sm:$0xff]
    %v117 = vld [vmem:[#allocation5 + $0x208] sm:$0xff]
    %v118 = vld [vmem:[#allocation5 + $0x210] sm:$0xff]
    %v119 = vld [vmem:[#allocation5 + $0x218] sm:$0xff]
    %v120 = vld [vmem:[#allocation5 + $0x220] sm:$0xff]
    %v121 = vld [vmem:[#allocation5 + $0x228] sm:$0xff]
    %v122 = vld [vmem:[#allocation5 + $0x230] sm:$0xff]
    %v123 = vld [vmem:[#allocation5 + $0x238] sm:$0xff]
    %v124 = vld [vmem:[#allocation5 + $0x240] sm:$0xff]
    %v125 = vld [vmem:[#allocation5 + $0x248] sm:$0xff]
    %v126 = vld [vmem:[#allocation5 + $0x250] sm:$0xff]
    %v127 = vld [vmem:[#allocation5 + $0x258] sm:$0xff]
    %v128 = vld [vmem:[#allocation5 + $0x260] sm:$0xff]
    %v129 = vld [vmem:[#allocation5 + $0x268] sm:$0xff]
    %v130 = vld [vmem:[#allocation5 + $0x270] sm:$0xff]
    %v131 = vld [vmem:[#allocation5 + $0x278] sm:$0xff]
    %v132 = vld [vmem:[#allocation5 + $0x280] sm:$0xff]
    %v133 = vld [vmem:[#allocation5 + $0x288] sm:$0xff]
    %v134 = vld [vmem:[#allocation5 + $0x290] sm:$0xff]
    %v135 = vld [vmem:[#allocation5 + $0x298] sm:$0xff]
    %v136 = vld [vmem:[#allocation5 + $0x2a0] sm:$0xff]
    %v137 = vld [vmem:[#allocation5 + $0x2a8] sm:$0xff]
    %v138 = vld [vmem:[#allocation5 + $0x2b0] sm:$0xff]
    %v139 = vld [vmem:[#allocation5 + $0x2b8] sm:$0xff]
    %v140 = vld [vmem:[#allocation5 + $0x2c0] sm:$0xff]
    %v141 = vld [vmem:[#allocation5 + $0x2c8] sm:$0xff]
    %v142 = vld [vmem:[#allocation5 + $0x2d0] sm:$0xff]
    %v143 = vld [vmem:[#allocation5 + $0x2d8] sm:$0xff]
    %v144 = vld [vmem:[#allocation5 + $0x2e0] sm:$0xff]
    %v145 = vld [vmem:[#allocation5 + $0x2e8] sm:$0xff]
    %v146 = vld [vmem:[#allocation5 + $0x2f0] sm:$0xff]
    %v147 = vld [vmem:[#allocation5 + $0x2f8] sm:$0xff]
    %v148 = vld [vmem:[#allocation5 + $0x300] sm:$0xff]
    %v149 = vld [vmem:[#allocation5 + $0x308] sm:$0xff]
    %v150 = vld [vmem:[#allocation5 + $0x310] sm:$0xff]
    %v151 = vld [vmem:[#allocation5 + $0x318] sm:$0xff]
    %v152 = vld [vmem:[#allocation5 + $0x320] sm:$0xff]
    %v153 = vld [vmem:[#allocation5 + $0x328] sm:$0xff]
    %v154 = vld [vmem:[#allocation5 + $0x330] sm:$0xff]
    %v155 = vld [vmem:[#allocation5 + $0x338] sm:$0xff]
    %v156 = vld [vmem:[#allocation5 + $0x340] sm:$0xff]
    %v157 = vld [vmem:[#allocation5 + $0x348] sm:$0xff]
    %v158 = vld [vmem:[#allocation5 + $0x350] sm:$0xff]
    %v159 = vld [vmem:[#allocation5 + $0x358] sm:$0xff]
    %v160 = vld [vmem:[#allocation5 + $0x360] sm:$0xff]
    %v161 = vld [vmem:[#allocation5 + $0x368] sm:$0xff]
    %v162 = vld [vmem:[#allocation5 + $0x370] sm:$0xff]
    %v163 = vld [vmem:[#allocation5 + $0x378] sm:$0xff]
    %v164 = vld [vmem:[%s2] sm:$0x1]
    %v166 = vperm.slane %v164, 0
    %168 = vmatpush.msra.mxu0 %v67
    %169 = vmatpush.msra.mxu0 %v66
    %170 = vmatpush.msra.mxu0 %v65
    %171 = vmatpush.msra.mxu0 %v64
    %172 = vmatpush.msra.mxu0 %v63
    %173 = vmatpush.msra.mxu0 %v62
    %174 = vmatpush.msra.mxu0 %v61
    %175 = vmatpush.msra.mxu0 %v60
    %176 = vmatpush.msra.mxu0 %v59
    %177 = vmatpush.msra.mxu0 %v58
    %178 = vmatpush.msra.mxu0 %v57
    %179 = vmatpush.msra.mxu0 %v56
    %180 = vmatpush.msra.mxu0 %v55
    %181 = vmatpush.msra.mxu0 %v54
    %182 = vmatpush.msra.mxu0 %v53
    %183 = vmatpush.msra.mxu0 %v52
    %184 = vmatmul.f32.gmra.mxu0 %v45
    %v185 = vpop.f32.mrf.mxu0
    %v186 = vadd.f32 %v166, %v185
    %187 = vdwg.mxu0
    %188 = vmatpush.msra.mxu0 %v83
    %189 = vmatpush.msra.mxu0 %v82
    %190 = vmatpush.msra.mxu0 %v81
    %191 = vmatpush.msra.mxu0 %v80
    %192 = vmatpush.msra.mxu0 %v79
    %193 = vmatpush.msra.mxu0 %v78
    %194 = vmatpush.msra.mxu0 %v77
    %195 = vmatpush.msra.mxu0 %v76
    %196 = vmatpush.msra.mxu0 %v75
    %197 = vmatpush.msra.mxu0 %v74
    %198 = vmatpush.msra.mxu0 %v73
    %199 = vmatpush.msra.mxu0 %v72
    %200 = vmatpush.msra.mxu0 %v71
    %201 = vmatpush.msra.mxu0 %v70
    %202 = vmatpush.msra.mxu0 %v69
    %203 = vmatpush.msra.mxu0 %v68
    %204 = vmatmul.f32.gmra.mxu0 %v46
    %v205 = vpop.f32.mrf.mxu0
    %v206 = vadd.f32 %v186, %v205
    %207 = vdwg.mxu0
    %208 = vmatpush.msra.mxu0 %v99
    %209 = vmatpush.msra.mxu0 %v98
    %210 = vmatpush.msra.mxu0 %v97
    %211 = vmatpush.msra.mxu0 %v96
    %212 = vmatpush.msra.mxu0 %v95
    %213 = vmatpush.msra.mxu0 %v94
    %214 = vmatpush.msra.mxu0 %v93
    %215 = vmatpush.msra.mxu0 %v92
    %216 = vmatpush.msra.mxu0 %v91
    %217 = vmatpush.msra.mxu0 %v90
    %218 = vmatpush.msra.mxu0 %v89
    %219 = vmatpush.msra.mxu0 %v88
    %220 = vmatpush.msra.mxu0 %v87
    %221 = vmatpush.msra.mxu0 %v86
    %222 = vmatpush.msra.mxu0 %v85
    %223 = vmatpush.msra.mxu0 %v84
    %224 = vmatmul.f32.gmra.mxu0 %v47
    %v225 = vpop.f32.mrf.mxu0
    %v226 = vadd.f32 %v206, %v225
    %227 = vdwg.mxu0
    %228 = vmatpush.msra.mxu0 %v115
    %229 = vmatpush.msra.mxu0 %v114
    %230 = vmatpush.msra.mxu0 %v113
    %231 = vmatpush.msra.mxu0 %v112
    %232 = vmatpush.msra.mxu0 %v111
    %233 = vmatpush.msra.mxu0 %v110
    %234 = vmatpush.msra.mxu0 %v109
    %235 = vmatpush.msra.mxu0 %v108
    %236 = vmatpush.msra.mxu0 %v107
    %237 = vmatpush.msra.mxu0 %v106
    %238 = vmatpush.msra.mxu0 %v105
    %239 = vmatpush.msra.mxu0 %v104
    %240 = vmatpush.msra.mxu0 %v103
    %241 = vmatpush.msra.mxu0 %v102
    %242 = vmatpush.msra.mxu0 %v101
    %243 = vmatpush.msra.mxu0 %v100
    %244 = vmatmul.f32.gmra.mxu0 %v48
    %v245 = vpop.f32.mrf.mxu0
    %v246 = vadd.f32 %v226, %v245
    %247 = vdwg.mxu0
    %248 = vmatpush.msra.mxu0 %v131
    %249 = vmatpush.msra.mxu0 %v130
    %250 = vmatpush.msra.mxu0 %v129
    %251 = vmatpush.msra.mxu0 %v128
    %252 = vmatpush.msra.mxu0 %v127
    %253 = vmatpush.msra.mxu0 %v126
    %254 = vmatpush.msra.mxu0 %v125
    %255 = vmatpush.msra.mxu0 %v124
    %256 = vmatpush.msra.mxu0 %v123
    %257 = vmatpush.msra.mxu0 %v122
    %258 = vmatpush.msra.mxu0 %v121
    %259 = vmatpush.msra.mxu0 %v120
    %260 = vmatpush.msra.mxu0 %v119
    %261 = vmatpush.msra.mxu0 %v118
    %262 = vmatpush.msra.mxu0 %v117
    %263 = vmatpush.msra.mxu0 %v116
    %264 = vmatmul.f32.gmra.mxu0 %v49
    %v265 = vpop.f32.mrf.mxu0
    %v266 = vadd.f32 %v246, %v265
    %267 = vdwg.mxu0
    %268 = vmatpush.msra.mxu0 %v147
    %269 = vmatpush.msra.mxu0 %v146
    %270 = vmatpush.msra.mxu0 %v145
    %271 = vmatpush.msra.mxu0 %v144
    %272 = vmatpush.msra.mxu0 %v143
    %273 = vmatpush.msra.mxu0 %v142
    %274 = vmatpush.msra.mxu0 %v141
    %275 = vmatpush.msra.mxu0 %v140
    %276 = vmatpush.msra.mxu0 %v139
    %277 = vmatpush.msra.mxu0 %v138
    %278 = vmatpush.msra.mxu0 %v137
    %279 = vmatpush.msra.mxu0 %v136
    %280 = vmatpush.msra.mxu0 %v135
    %281 = vmatpush.msra.mxu0 %v134
    %282 = vmatpush.msra.mxu0 %v133
    %283 = vmatpush.msra.mxu0 %v132
    %284 = vmatmul.f32.gmra.mxu0 %v50
    %v285 = vpop.f32.mrf.mxu0
    %v286 = vadd.f32 %v266, %v285
    %287 = vdwg.mxu0
    %288 = vmatpush.msra.mxu0 %v163
    %289 = vmatpush.msra.mxu0 %v162
    %290 = vmatpush.msra.mxu0 %v161
    %291 = vmatpush.msra.mxu0 %v160
    %292 = vmatpush.msra.mxu0 %v159
    %293 = vmatpush.msra.mxu0 %v158
    %294 = vmatpush.msra.mxu0 %v157
    %295 = vmatpush.msra.mxu0 %v156
    %296 = vmatpush.msra.mxu0 %v155
    %297 = vmatpush.msra.mxu0 %v154
    %298 = vmatpush.msra.mxu0 %v153
    %299 = vmatpush.msra.mxu0 %v152
    %300 = vmatpush.msra.mxu0 %v151
    %301 = vmatpush.msra.mxu0 %v150
    %302 = vmatpush.msra.mxu0 %v149
    %303 = vmatpush.msra.mxu0 %v148
    %304 = vmatmul.f32.gmra.mxu0 %v51
    %v305 = vpop.f32.mrf.mxu0
    %v306 = vadd.f32 %v286, %v305
    %307 = vdwg.mxu0
    %308 = vst [vmem:[#allocation7] sm:$0xff] %v306
    // Predicated region
    $region22: #{tpu_custom_call.1} parent=1 // pred_check
      _
    $region23: #{tpu_custom_call.1} parent=1 // pred_check_branch
      %310 = sbr.rel (0) target = $region25
    $region24: #{tpu_custom_call.1} parent=1 // pred_region
      %312 = vsyncadd [#allocation4], 0
      %s314 = sshll.u32 [#allocation7], 4
      %s315 = int_to_ptr.vmem [resolvable:$true] %s314
      %s316 = sshll.u32 %s3, 4
      %s317 = int_to_ptr.hbm [resolvable:$true] %s316
      %319 = dma.vmem_to_hbm [thread:$0]  %s315, 128, %s317, [#allocation4]
    $region25: #{tpu_custom_call.1} parent=1 // pred_fallthru
      _
    // Predicated region
    $region26: #{tpu_custom_call.1} parent=1 // pred_check
      _
    $region27: #{tpu_custom_call.1} parent=1 // pred_check_branch
      %321 = sbr.rel (0) target = $region29
    $region28: #{tpu_custom_call.1} parent=1 // pred_region
      %323 = dma.done [#allocation4], 128
    $region29: #{tpu_custom_call.1} parent=1 // pred_fallthru
      _
    %324 = vsyncpa [#allocation3], 1
    %325 = vsyncpa [#allocation6], 1
    %326 = vsyncpa [#allocation4], 1

// kernel: tpu_custom_call.1
$region0: #{tpu_custom_call.1}
  #allocation0 [shape = 'u32[]', space=smem, size = 0x4, offset = 0x4, fixed_abs, tag = 'smem constant byte address 0x4 - core index']
  #allocation1 [shape = 'u32[72,128]{1,0:T(1,128)}', space=vmem, size = 0x9000, scoped, tag = 'internal scratch']
  %s0 = inlined_call_operand.hbm [shape: f32[8,896], index: 0, kind: input, shape index: {}]
  %s1 = inlined_call_operand.hbm [shape: f32[896,128], index: 1, kind: input, shape index: {}]
  %s2 = inlined_call_operand.vmem [shape: f32[1,128], index: 2, kind: input, shape index: {}]
  %s3 = inlined_call_operand.hbm [shape: f32[8,128], index: 3, kind: output, shape index: {}]
  %s4 = sld [smem:[#allocation0]]
  $region30: #{tpu_custom_call.1} parent=0
    _
  %s6 = ssub.s32 1, %s4
  %s7 = scalar_select 0, %s6, %s4
  $region1: #{tpu_custom_call.1} parent=0
    #allocation2 [shape = 'u8[28672]{0}', space=vmem, size = 0x7000, scoped, tag = 'input window, operand 0, single buffered']
    #allocation3 [shape = 's32[1]{0}', space=sflag, size = 0x4, scoped, tag = 'scoped memory for tpu_custom_call.1']
    #allocation4 [shape = 's32[1]{0}', space=sflag, size = 0x4, scoped, tag = 'scoped memory for tpu_custom_call.1']
    #allocation5 [shape = 'u8[458752]{0}', space=vmem, size = 0x70000, scoped, tag = 'input window, operand 1, single buffered']
    #allocation6 [shape = 's32[1]{0}', space=sflag, size = 0x4, scoped, tag = 'scoped memory for tpu_custom_call.1']
    #allocation7 [shape = 'u8[4096]{0}', space=vmem, size = 0x1000, scoped, tag = 'output window, operand 0, single buffered']
    %8 = vsyncpa [#allocation3], 0
    %9 = vsyncpa [#allocation6], 0
    %10 = vsyncpa [#allocation4], 0
    // Predicated region
    $region2: #{tpu_custom_call.1} parent=1 // pred_check
      _
    $region3: #{tpu_custom_call.1} parent=1 // pred_check_branch
      %12 = sbr.rel (0) target = $region5
    $region4: #{tpu_custom_call.1} parent=1 // pred_region
      %14 = vsyncadd [#allocation3], 0
      %s16 = sshll.u32 %s0, 4
      %s17 = int_to_ptr.hbm [resolvable:$true] %s16
      %s18 = sshll.u32 [#allocation2], 4
      %s19 = int_to_ptr.vmem [resolvable:$true] %s18
      %21 = dma.hbm_to_vmem [thread:$0]  %s17, 896, %s19, [#allocation3]
    $region5: #{tpu_custom_call.1} parent=1 // pred_fallthru
      _
    // Predicated region
    $region6: #{tpu_custom_call.1} parent=1 // pred_check
      _
    $region7: #{tpu_custom_call.1} parent=1 // pred_check_branch
      %23 = sbr.rel (0) target = $region9
    $region8: #{tpu_custom_call.1} parent=1 // pred_region
      %25 = vsyncadd [#allocation6], 0
      %s26 = sshll.u32 %s1, 4
      %s27 = int_to_ptr.hbm [resolvable:$true] %s26
      %s28 = sshll.u32 [#allocation5], 4
      %s29 = int_to_ptr.vmem [resolvable:$true] %s28
      %34 = dma.hbm_to_vmem [thread:$0]  %s27, 14336, %s29, [#allocation6], 128, 128, 8
    $region9: #{tpu_custom_call.1} parent=1 // pred_fallthru
      _
    // Predicated region
    $region10: #{tpu_custom_call.1} parent=1 // pred_check
      _
    $region11: #{tpu_custom_call.1} parent=1 // pred_check_branch
      %36 = sbr.rel (0) target = $region13
    $region12: #{tpu_custom_call.1} parent=1 // pred_region
      _
    $region13: #{tpu_custom_call.1} parent=1 // pred_fallthru
      _
    // Predicated region
    $region14: #{tpu_custom_call.1} parent=1 // pred_check
      _
    $region15: #{tpu_custom_call.1} parent=1 // pred_check_branch
      %38 = sbr.rel (0) target = $region17
    $region16: #{tpu_custom_call.1} parent=1 // pred_region
      %40 = dma.done [#allocation3], 896
    $region17: #{tpu_custom_call.1} parent=1 // pred_fallthru
      _
    // Predicated region
    $region18: #{tpu_custom_call.1} parent=1 // pred_check
      _
    $region19: #{tpu_custom_call.1} parent=1 // pred_check_branch
      %42 = sbr.rel (0) target = $region21
    $region20: #{tpu_custom_call.1} parent=1 // pred_region
      %44 = dma.done [#allocation6], 14336
    $region21: #{tpu_custom_call.1} parent=1 // pred_fallthru
      _
    %v45 = vld [vmem:[#allocation2] sm:$0xff]
    %v46 = vld [vmem:[#allocation2 + $0x8] sm:$0xff]
    %v47 = vld [vmem:[#allocation2 + $0x10] sm:$0xff]
    %v48 = vld [vmem:[#allocation2 + $0x18] sm:$0xff]
    %v49 = vld [vmem:[#allocation2 + $0x20] sm:$0xff]
    %v50 = vld [vmem:[#allocation2 + $0x28] sm:$0xff]
    %v51 = vld [vmem:[#allocation2 + $0x30] sm:$0xff]
    %v52 = vld [vmem:[#allocation5] sm:$0xff]
    %v53 = vld [vmem:[#allocation5 + $0x8] sm:$0xff]
    %v54 = vld [vmem:[#allocation5 + $0x10] sm:$0xff]
    %v55 = vld [vmem:[#allocation5 + $0x18] sm:$0xff]
    %v56 = vld [vmem:[#allocation5 + $0x20] sm:$0xff]
    %v57 = vld [vmem:[#allocation5 + $0x28] sm:$0xff]
    %v58 = vld [vmem:[#allocation5 + $0x30] sm:$0xff]
    %v59 = vld [vmem:[#allocation5 + $0x38] sm:$0xff]
    %v60 = vld [vmem:[#allocation5 + $0x40] sm:$0xff]
    %v61 = vld [vmem:[#allocation5 + $0x48] sm:$0xff]
    %v62 = vld [vmem:[#allocation5 + $0x50] sm:$0xff]
    %v63 = vld [vmem:[#allocation5 + $0x58] sm:$0xff]
    %v64 = vld [vmem:[#allocation5 + $0x60] sm:$0xff]
    %v65 = vld [vmem:[#allocation5 + $0x68] sm:$0xff]
    %v66 = vld [vmem:[#allocation5 + $0x70] sm:$0xff]
    %v67 = vld [vmem:[#allocation5 + $0x78] sm:$0xff]
    %v68 = vld [vmem:[#allocation5 + $0x80] sm:$0xff]
    %v69 = vld [vmem:[#allocation5 + $0x88] sm:$0xff]
    %v70 = vld [vmem:[#allocation5 + $0x90] sm:$0xff]
    %v71 = vld [vmem:[#allocation5 + $0x98] sm:$0xff]
    %v72 = vld [vmem:[#allocation5 + $0xa0] sm:$0xff]
    %v73 = vld [vmem:[#allocation5 + $0xa8] sm:$0xff]
    %v74 = vld [vmem:[#allocation5 + $0xb0] sm:$0xff]
    %v75 = vld [vmem:[#allocation5 + $0xb8] sm:$0xff]
    %v76 = vld [vmem:[#allocation5 + $0xc0] sm:$0xff]
    %v77 = vld [vmem:[#allocation5 + $0xc8] sm:$0xff]
    %v78 = vld [vmem:[#allocation5 + $0xd0] sm:$0xff]
    %v79 = vld [vmem:[#allocation5 + $0xd8] sm:$0xff]
    %v80 = vld [vmem:[#allocation5 + $0xe0] sm:$0xff]
    %v81 = vld [vmem:[#allocation5 + $0xe8] sm:$0xff]
    %v82 = vld [vmem:[#allocation5 + $0xf0] sm:$0xff]
    %v83 = vld [vmem:[#allocation5 + $0xf8] sm:$0xff]
    %v84 = vld [vmem:[#allocation5 + $0x100] sm:$0xff]
    %v85 = vld [vmem:[#allocation5 + $0x108] sm:$0xff]
    %v86 = vld [vmem:[#allocation5 + $0x110] sm:$0xff]
    %v87 = vld [vmem:[#allocation5 + $0x118] sm:$0xff]
    %v88 = vld [vmem:[#allocation5 + $0x120] sm:$0xff]
    %v89 = vld [vmem:[#allocation5 + $0x128] sm:$0xff]
    %v90 = vld [vmem:[#allocation5 + $0x130] sm:$0xff]
    %v91 = vld [vmem:[#allocation5 + $0x138] sm:$0xff]
    %v92 = vld [vmem:[#allocation5 + $0x140] sm:$0xff]
    %v93 = vld [vmem:[#allocation5 + $0x148] sm:$0xff]
    %v94 = vld [vmem:[#allocation5 + $0x150] sm:$0xff]
    %v95 = vld [vmem:[#allocation5 + $0x158] sm:$0xff]
    %v96 = vld [vmem:[#allocation5 + $0x160] sm:$0xff]
    %v97 = vld [vmem:[#allocation5 + $0x168] sm:$0xff]
    %v98 = vld [vmem:[#allocation5 + $0x170] sm:$0xff]
    %v99 = vld [vmem:[#allocation5 + $0x178] sm:$0xff]
    %v100 = vld [vmem:[#allocation5 + $0x180] sm:$0xff]
    %v101 = vld [vmem:[#allocation5 + $0x188] sm:$0xff]
    %v102 = vld [vmem:[#allocation5 + $0x190] sm:$0xff]
    %v103 = vld [vmem:[#allocation5 + $0x198] sm:$0xff]
    %v104 = vld [vmem:[#allocation5 + $0x1a0] sm:$0xff]
    %v105 = vld [vmem:[#allocation5 + $0x1a8] sm:$0xff]
    %v106 = vld [vmem:[#allocation5 + $0x1b0] sm:$0xff]
    %v107 = vld [vmem:[#allocation5 + $0x1b8] sm:$0xff]
    %v108 = vld [vmem:[#allocation5 + $0x1c0] sm:$0xff]
    %v109 = vld [vmem:[#allocation5 + $0x1c8] sm:$0xff]
    %v110 = vld [vmem:[#allocation5 + $0x1d0] sm:$0xff]
    %v111 = vld [vmem:[#allocation5 + $0x1d8] sm:$0xff]
    %v112 = vld [vmem:[#allocation5 + $0x1e0] sm:$0xff]
    %v113 = vld [vmem:[#allocation5 + $0x1e8] sm:$0xff]
    %v114 = vld [vmem:[#allocation5 + $0x1f0] sm:$0xff]
    %v115 = vld [vmem:[#allocation5 + $0x1f8] sm:$0xff]
    %v116 = vld [vmem:[#allocation5 + $0x200] sm:$0xff]
    %v117 = vld [vmem:[#allocation5 + $0x208] sm:$0xff]
    %v118 = vld [vmem:[#allocation5 + $0x210] sm:$0xff]
    %v119 = vld [vmem:[#allocation5 + $0x218] sm:$0xff]
    %v120 = vld [vmem:[#allocation5 + $0x220] sm:$0xff]
    %v121 = vld [vmem:[#allocation5 + $0x228] sm:$0xff]
    %v122 = vld [vmem:[#allocation5 + $0x230] sm:$0xff]
    %v123 = vld [vmem:[#allocation5 + $0x238] sm:$0xff]
    %v124 = vld [vmem:[#allocation5 + $0x240] sm:$0xff]
    %v125 = vld [vmem:[#allocation5 + $0x248] sm:$0xff]
    %v126 = vld [vmem:[#allocation5 + $0x250] sm:$0xff]
    %v127 = vld [vmem:[#allocation5 + $0x258] sm:$0xff]
    %v128 = vld [vmem:[#allocation5 + $0x260] sm:$0xff]
    %v129 = vld [vmem:[#allocation5 + $0x268] sm:$0xff]
    %v130 = vld [vmem:[#allocation5 + $0x270] sm:$0xff]
    %v131 = vld [vmem:[#allocation5 + $0x278] sm:$0xff]
    %v132 = vld [vmem:[#allocation5 + $0x280] sm:$0xff]
    %v133 = vld [vmem:[#allocation5 + $0x288] sm:$0xff]
    %v134 = vld [vmem:[#allocation5 + $0x290] sm:$0xff]
    %v135 = vld [vmem:[#allocation5 + $0x298] sm:$0xff]
    %v136 = vld [vmem:[#allocation5 + $0x2a0] sm:$0xff]
    %v137 = vld [vmem:[#allocation5 + $0x2a8] sm:$0xff]
    %v138 = vld [vmem:[#allocation5 + $0x2b0] sm:$0xff]
    %v139 = vld [vmem:[#allocation5 + $0x2b8] sm:$0xff]
    %v140 = vld [vmem:[#allocation5 + $0x2c0] sm:$0xff]
    %v141 = vld [vmem:[#allocation5 + $0x2c8] sm:$0xff]
    %v142 = vld [vmem:[#allocation5 + $0x2d0] sm:$0xff]
    %v143 = vld [vmem:[#allocation5 + $0x2d8] sm:$0xff]
    %v144 = vld [vmem:[#allocation5 + $0x2e0] sm:$0xff]
    %v145 = vld [vmem:[#allocation5 + $0x2e8] sm:$0xff]
    %v146 = vld [vmem:[#allocation5 + $0x2f0] sm:$0xff]
    %v147 = vld [vmem:[#allocation5 + $0x2f8] sm:$0xff]
    %v148 = vld [vmem:[#allocation5 + $0x300] sm:$0xff]
    %v149 = vld [vmem:[#allocation5 + $0x308] sm:$0xff]
    %v150 = vld [vmem:[#allocation5 + $0x310] sm:$0xff]
    %v151 = vld [vmem:[#allocation5 + $0x318] sm:$0xff]
    %v152 = vld [vmem:[#allocation5 + $0x320] sm:$0xff]
    %v153 = vld [vmem:[#allocation5 + $0x328] sm:$0xff]
    %v154 = vld [vmem:[#allocation5 + $0x330] sm:$0xff]
    %v155 = vld [vmem:[#allocation5 + $0x338] sm:$0xff]
    %v156 = vld [vmem:[#allocation5 + $0x340] sm:$0xff]
    %v157 = vld [vmem:[#allocation5 + $0x348] sm:$0xff]
    %v158 = vld [vmem:[#allocation5 + $0x350] sm:$0xff]
    %v159 = vld [vmem:[#allocation5 + $0x358] sm:$0xff]
    %v160 = vld [vmem:[#allocation5 + $0x360] sm:$0xff]
    %v161 = vld [vmem:[#allocation5 + $0x368] sm:$0xff]
    %v162 = vld [vmem:[#allocation5 + $0x370] sm:$0xff]
    %v163 = vld [vmem:[#allocation5 + $0x378] sm:$0xff]
    %v164 = vld [vmem:[%s2] sm:$0x1]
    %v166 = vperm.slane %v164, 0
    %168 = vmatpush.msra.mxu0 %v67
    %169 = vmatpush.msra.mxu0 %v66
    %170 = vmatpush.msra.mxu0 %v65
    %171 = vmatpush.msra.mxu0 %v64
    %172 = vmatpush.msra.mxu0 %v63
    %173 = vmatpush.msra.mxu0 %v62
    %174 = vmatpush.msra.mxu0 %v61
    %175 = vmatpush.msra.mxu0 %v60
    %176 = vmatpush.msra.mxu0 %v59
    %177 = vmatpush.msra.mxu0 %v58
    %178 = vmatpush.msra.mxu0 %v57
    %179 = vmatpush.msra.mxu0 %v56
    %180 = vmatpush.msra.mxu0 %v55
    %181 = vmatpush.msra.mxu0 %v54
    %182 = vmatpush.msra.mxu0 %v53
    %183 = vmatpush.msra.mxu0 %v52
    %184 = vmatmul.f32.gmra.mxu0 %v45
    %v185 = vpop.f32.mrf.mxu0
    %v186 = vadd.f32 %v166, %v185
    %187 = vdwg.mxu0
    %188 = vmatpush.msra.mxu0 %v83
    %189 = vmatpush.msra.mxu0 %v82
    %190 = vmatpush.msra.mxu0 %v81
    %191 = vmatpush.msra.mxu0 %v80
    %192 = vmatpush.msra.mxu0 %v79
    %193 = vmatpush.msra.mxu0 %v78
    %194 = vmatpush.msra.mxu0 %v77
    %195 = vmatpush.msra.mxu0 %v76
    %196 = vmatpush.msra.mxu0 %v75
    %197 = vmatpush.msra.mxu0 %v74
    %198 = vmatpush.msra.mxu0 %v73
    %199 = vmatpush.msra.mxu0 %v72
    %200 = vmatpush.msra.mxu0 %v71
    %201 = vmatpush.msra.mxu0 %v70
    %202 = vmatpush.msra.mxu0 %v69
    %203 = vmatpush.msra.mxu0 %v68
    %204 = vmatmul.f32.gmra.mxu0 %v46
    %v205 = vpop.f32.mrf.mxu0
    %v206 = vadd.f32 %v186, %v205
    %207 = vdwg.mxu0
    %208 = vmatpush.msra.mxu0 %v99
    %209 = vmatpush.msra.mxu0 %v98
    %210 = vmatpush.msra.mxu0 %v97
    %211 = vmatpush.msra.mxu0 %v96
    %212 = vmatpush.msra.mxu0 %v95
    %213 = vmatpush.msra.mxu0 %v94
    %214 = vmatpush.msra.mxu0 %v93
    %215 = vmatpush.msra.mxu0 %v92
    %216 = vmatpush.msra.mxu0 %v91
    %217 = vmatpush.msra.mxu0 %v90
    %218 = vmatpush.msra.mxu0 %v89
    %219 = vmatpush.msra.mxu0 %v88
    %220 = vmatpush.msra.mxu0 %v87
    %221 = vmatpush.msra.mxu0 %v86
    %222 = vmatpush.msra.mxu0 %v85
    %223 = vmatpush.msra.mxu0 %v84
    %224 = vmatmul.f32.gmra.mxu0 %v47
    %v225 = vpop.f32.mrf.mxu0
    %v226 = vadd.f32 %v206, %v225
    %227 = vdwg.mxu0
    %228 = vmatpush.msra.mxu0 %v115
    %229 = vmatpush.msra.mxu0 %v114
    %230 = vmatpush.msra.mxu0 %v113
    %231 = vmatpush.msra.mxu0 %v112
    %232 = vmatpush.msra.mxu0 %v111
    %233 = vmatpush.msra.mxu0 %v110
    %234 = vmatpush.msra.mxu0 %v109
    %235 = vmatpush.msra.mxu0 %v108
    %236 = vmatpush.msra.mxu0 %v107
    %237 = vmatpush.msra.mxu0 %v106
    %238 = vmatpush.msra.mxu0 %v105
    %239 = vmatpush.msra.mxu0 %v104
    %240 = vmatpush.msra.mxu0 %v103
    %241 = vmatpush.msra.mxu0 %v102
    %242 = vmatpush.msra.mxu0 %v101
    %243 = vmatpush.msra.mxu0 %v100
    %244 = vmatmul.f32.gmra.mxu0 %v48
    %v245 = vpop.f32.mrf.mxu0
    %v246 = vadd.f32 %v226, %v245
    %247 = vdwg.mxu0
    %248 = vmatpush.msra.mxu0 %v131
    %249 = vmatpush.msra.mxu0 %v130
    %250 = vmatpush.msra.mxu0 %v129
    %251 = vmatpush.msra.mxu0 %v128
    %252 = vmatpush.msra.mxu0 %v127
    %253 = vmatpush.msra.mxu0 %v126
    %254 = vmatpush.msra.mxu0 %v125
    %255 = vmatpush.msra.mxu0 %v124
    %256 = vmatpush.msra.mxu0 %v123
    %257 = vmatpush.msra.mxu0 %v122
    %258 = vmatpush.msra.mxu0 %v121
    %259 = vmatpush.msra.mxu0 %v120
    %260 = vmatpush.msra.mxu0 %v119
    %261 = vmatpush.msra.mxu0 %v118
    %262 = vmatpush.msra.mxu0 %v117
    %263 = vmatpush.msra.mxu0 %v116
    %264 = vmatmul.f32.gmra.mxu0 %v49
    %v265 = vpop.f32.mrf.mxu0
    %v266 = vadd.f32 %v246, %v265
    %267 = vdwg.mxu0
    %268 = vmatpush.msra.mxu0 %v147
    %269 = vmatpush.msra.mxu0 %v146
    %270 = vmatpush.msra.mxu0 %v145
    %271 = vmatpush.msra.mxu0 %v144
    %272 = vmatpush.msra.mxu0 %v143
    %273 = vmatpush.msra.mxu0 %v142
    %274 = vmatpush.msra.mxu0 %v141
    %275 = vmatpush.msra.mxu0 %v140
    %276 = vmatpush.msra.mxu0 %v139
    %277 = vmatpush.msra.mxu0 %v138
    %278 = vmatpush.msra.mxu0 %v137
    %279 = vmatpush.msra.mxu0 %v136
    %280 = vmatpush.msra.mxu0 %v135
    %281 = vmatpush.msra.mxu0 %v134
    %282 = vmatpush.msra.mxu0 %v133
    %283 = vmatpush.msra.mxu0 %v132
    %284 = vmatmul.f32.gmra.mxu0 %v50
    %v285 = vpop.f32.mrf.mxu0
    %v286 = vadd.f32 %v266, %v285
    %287 = vdwg.mxu0
    %288 = vmatpush.msra.mxu0 %v163
    %289 = vmatpush.msra.mxu0 %v162
    %290 = vmatpush.msra.mxu0 %v161
    %291 = vmatpush.msra.mxu0 %v160
    %292 = vmatpush.msra.mxu0 %v159
    %293 = vmatpush.msra.mxu0 %v158
    %294 = vmatpush.msra.mxu0 %v157
    %295 = vmatpush.msra.mxu0 %v156
    %296 = vmatpush.msra.mxu0 %v155
    %297 = vmatpush.msra.mxu0 %v154
    %298 = vmatpush.msra.mxu0 %v153
    %299 = vmatpush.msra.mxu0 %v152
    %300 = vmatpush.msra.mxu0 %v151
    %301 = vmatpush.msra.mxu0 %v150
    %302 = vmatpush.msra.mxu0 %v149
    %303 = vmatpush.msra.mxu0 %v148
    %304 = vmatmul.f32.gmra.mxu0 %v51
    %v305 = vpop.f32.mrf.mxu0
    %v306 = vadd.f32 %v286, %v305
    %307 = vdwg.mxu0
    %308 = vst [vmem:[#allocation7] sm:$0xff] %v306
    // Predicated region
    $region22: #{tpu_custom_call.1} parent=1 // pred_check
      _
    $region23: #{tpu_custom_call.1} parent=1 // pred_check_branch
      %310 = sbr.rel (0) target = $region25
    $region24: #{tpu_custom_call.1} parent=1 // pred_region
      %312 = vsyncadd [#allocation4], 0
      %s314 = sshll.u32 [#allocation7], 4
      %s315 = int_to_ptr.vmem [resolvable:$true] %s314
      %s316 = sshll.u32 %s3, 4
      %s317 = int_to_ptr.hbm [resolvable:$true] %s316
      %319 = dma.vmem_to_hbm [thread:$0]  %s315, 128, %s317, [#allocation4]
    $region25: #{tpu_custom_call.1} parent=1 // pred_fallthru
      _
    // Predicated region
    $region26: #{tpu_custom_call.1} parent=1 // pred_check
      _
    $region27: #{tpu_custom_call.1} parent=1 // pred_check_branch
      %321 = sbr.rel (0) target = $region29
    $region28: #{tpu_custom_call.1} parent=1 // pred_region
      %323 = dma.done [#allocation4], 128
    $region29: #{tpu_custom_call.1} parent=1 // pred_fallthru
      _
    %324 = vsyncpa [#allocation3], 1
    %325 = vsyncpa [#allocation6], 1
    %326 = vsyncpa [#allocation4], 1

</llo_original>
